<compile_context>
chip_gen: v6e
topology: v6e:2x2x1
jax: 0.10.0
libtpu: 0.0.40
codegen_flags: <defaults>
</compile_context>

<pallas_src>
import functools

import jax
import jax.numpy as jnp
from jax.experimental import pallas as pl
from jax.experimental.pallas import tpu as pltpu


def _round_up(n, m):
    return ((n + m - 1) // m) * m


def cvae_kernel(
    # per-row data (bf16 / f32)
    xcc_ref, eps_ref,
    # encoder: merged layer-0 weight + bias, layer-1 weight + bias
    e0w_ref, e0b_ref, e1w_ref, e1b_ref,
    # fused means|log_var head
    mlw_ref, mlb_ref,
    # decoder: z-chunk weight, [x|c|ctx]-chunk weight (x rows zeroed), bias, head
    d0wz_ref, d0wr_ref, d0b_ref, d1w_ref, d1b_ref,
    # outputs
    recon_ref, kldrow_ref,
):
    f32 = jnp.float32
    bf16 = jnp.bfloat16
    latent = eps_ref.shape[1]

    xcc = xcc_ref[...]                                     # (T, Dx+Dc+Dh) bf16

    # ---- encoder MLP (concat layer merged into a single MXU pass) ----------
    h = jnp.dot(xcc, e0w_ref[...], preferred_element_type=f32) + e0b_ref[...]
    h = jnp.maximum(h, 0.0).astype(bf16)                   # ReLU
    h = jnp.dot(h, e1w_ref[...], preferred_element_type=f32) + e1b_ref[...]
    h = jnp.maximum(h, 0.0).astype(bf16)                   # ReLU

    # ---- fused means / log_var heads (f32) ----------------------------------
    ml = jnp.dot(h, mlw_ref[...], preferred_element_type=f32) + mlb_ref[...]
    means = ml[:, :latent]
    log_var = ml[:, latent:]

    # ---- reparameterization: z = mean + exp(0.5*log_var) * eps --------------
    std = jnp.exp(0.5 * log_var)
    z = (means + std * eps_ref[...]).astype(bf16)

    # ---- decoder MLP: z-chunk + [x|c|ctx]-chunk (x rows of weight are zero) -
    h2 = (jnp.dot(z, d0wz_ref[...], preferred_element_type=f32)
          + jnp.dot(xcc, d0wr_ref[...], preferred_element_type=f32)
          + d0b_ref[...])
    h2 = jnp.maximum(h2, 0.0).astype(bf16)                 # ReLU
    logits = jnp.dot(h2, d1w_ref[...], preferred_element_type=f32) + d1b_ref[...]
    recon_ref[...] = jax.nn.sigmoid(logits)                # f32 sigmoid

    # ---- per-row KLD partial; note std*std == exp(log_var) ------------------
    kld_terms = 1.0 + log_var - means * means - std * std
    kldrow_ref[...] = jnp.sum(kld_terms, axis=-1, keepdims=True)


def cvae_forward(x, c, context, eps, params, tile=512):
    """x:(B,S,Dx) c:(B,S,Dc) context:(B,S,Dh) eps:(B,S,latent) -> (recon, KLD)."""
    B, S, Dx = x.shape
    Dc = c.shape[-1]
    Dh = context.shape[-1]
    latent = eps.shape[-1]
    rows = B * S
    Din = Dx + Dc + Dh
    Dout = params["d1w"].shape[1]
    dec_hidden = params["d0wz"].shape[1]
    f32, bf16 = jnp.float32, jnp.bfloat16

    # --- algebraic fusions (trace-time, free at runtime) ---------------------
    # fold the bias-free context projection into the first enc/dec layers
    e0wt_f = jnp.dot(params["cw"], params["e0wt"])         # (Dh, enc_hidden)
    d0wt_f = jnp.dot(params["cw"], params["d0wt"])         # (Dh, dec_hidden)
    # merge the split first-layer matmuls; decoder "rest" weight zero-pads the
    # x rows so the same concatenated [x|c|ctx] input block is reused.
    e0w = jnp.concatenate([params["e0wx"], params["e0wc"], e0wt_f], axis=0).astype(bf16)
    d0wr = jnp.concatenate(
        [jnp.zeros((Dx, dec_hidden), f32), params["d0wc"], d0wt_f], axis=0).astype(bf16)
    d0wz = params["d0wz"].astype(bf16)
    e1w = params["e1w"].astype(bf16)
    d1w = params["d1w"].astype(bf16)
    mlw = jnp.concatenate([params["mw"], params["lw"]], axis=1).astype(bf16)
    mlb = jnp.concatenate([params["mb"], params["lb"]], axis=1).astype(f32)
    e0b = params["e0b"].astype(f32)
    e1b = params["e1b"].astype(f32)
    d0b = params["d0b"].astype(f32)
    d1b = params["d1b"].astype(f32)

    # --- data prep: concat once, bf16, flatten rows, pad to a tile multiple --
    xcc = jnp.concatenate(
        [x.reshape(rows, Dx), c.reshape(rows, Dc), context.reshape(rows, Dh)],
        axis=1).astype(bf16)
    eps2 = eps.reshape(rows, latent).astype(f32)           # tiny, keep f32

    tile = min(tile, _round_up(rows, 8))                   # multiple of 8
    rows_p = _round_up(rows, tile)
    if rows_p != rows:
        xcc = jnp.pad(xcc, ((0, rows_p - rows), (0, 0)))
        eps2 = jnp.pad(eps2, ((0, rows_p - rows), (0, 0)))
    num_blocks = rows_p // tile

    row_spec = lambda feat: pl.BlockSpec((tile, feat), lambda i: (i, 0))
    w_spec = lambda arr: pl.BlockSpec(arr.shape, lambda i: (0, 0))  # VMEM-resident

    recon_p, kld_rows = pl.pallas_call(
        cvae_kernel,
        grid=(num_blocks,),
        in_specs=[
            row_spec(Din), row_spec(latent),
            w_spec(e0w), w_spec(e0b), w_spec(e1w), w_spec(e1b),
            w_spec(mlw), w_spec(mlb),
            w_spec(d0wz), w_spec(d0wr), w_spec(d0b),
            w_spec(d1w), w_spec(d1b),
        ],
        out_specs=(row_spec(Dout), row_spec(1)),
        out_shape=(
            jax.ShapeDtypeStruct((rows_p, Dout), f32),
            jax.ShapeDtypeStruct((rows_p, 1), f32),
        ),
        compiler_params=pltpu.CompilerParams(
            dimension_semantics=("parallel",),              # v7x megacore shard
            vmem_limit_bytes=32 * 1024 * 1024,              # safe on 64 MiB v7x
        ),
    )(xcc, eps2, e0w, e0b, e1w, e1b, mlw, mlb, d0wz, d0wr, d0b, d1w, d1b)

    recon = recon_p[:rows].reshape(B, S, Dout)
    kld = -0.5 * jnp.sum(kld_rows[:rows])
    return recon, kld


def cvae_reference(x, c, context, eps, params):
    """Pure-JAX f32 reference matching the PyTorch module semantics."""
    B, S, Dx = x.shape
    rows = B * S
    x2 = x.reshape(rows, Dx)
    c2 = c.reshape(rows, -1)
    t2 = context.reshape(rows, -1)
    e2 = eps.reshape(rows, -1)
    ctx = t2 @ params["cw"]
    h = jnp.maximum(x2 @ params["e0wx"] + c2 @ params["e0wc"]
                    + ctx @ params["e0wt"] + params["e0b"], 0.0)
    h = jnp.maximum(h @ params["e1w"] + params["e1b"], 0.0)
    means = h @ params["mw"] + params["mb"]
    log_var = h @ params["lw"] + params["lb"]
    std = jnp.exp(0.5 * log_var)
    z = means + std * e2
    h2 = jnp.maximum(z @ params["d0wz"] + c2 @ params["d0wc"]
                     + ctx @ params["d0wt"] + params["d0b"], 0.0)
    recon = jax.nn.sigmoid(h2 @ params["d1w"] + params["d1b"])
    kld = -0.5 * jnp.sum(1.0 + log_var - means ** 2 - jnp.exp(log_var))
    return recon.reshape(B, S, -1), kld


def make_params(key, Dx, Dc, Dh, imm, latent, enc_hidden, dec_hidden, Dout):
    """Deterministic synthetic parameter init. Weights stored as (in, out)."""
    ks = jax.random.split(key, 16)
    s = 0.1

    def w(k, shape):
        return (s * jax.random.normal(k, shape)).astype(jnp.float32)

    enc_in0 = Dx + Dc + imm          # first enc layer input after concat
    dec_in0 = latent + Dc + imm      # first dec layer input after concat

    e0w = w(ks[1], (enc_in0, enc_hidden))
    d0w = w(ks[8], (dec_in0, dec_hidden))
    return {
        "cw":  w(ks[0], (Dh, imm)),
        # split enc layer-0 weight along its input rows: [x | c | context]
        "e0wx": e0w[:Dx], "e0wc": e0w[Dx:Dx + Dc], "e0wt": e0w[Dx + Dc:],
        "e0b": w(ks[2], (1, enc_hidden)),
        "e1w": w(ks[3], (enc_hidden, enc_hidden)),
        "e1b": w(ks[4], (1, enc_hidden)),
        "mw":  w(ks[5], (enc_hidden, latent)), "mb": w(ks[6], (1, latent)),
        "lw":  w(ks[7], (enc_hidden, latent)), "lb": w(ks[9], (1, latent)),
        # split dec layer-0 weight along its input rows: [z | c | context]
        "d0wz": d0w[:latent], "d0wc": d0w[latent:latent + Dc],
        "d0wt": d0w[latent + Dc:],
        "d0b": w(ks[10], (1, dec_hidden)),
        "d1w": w(ks[11], (dec_hidden, Dout)),
        "d1b": w(ks[12], (1, Dout)),
    }


if __name__ == "__main__":
    # small synthetic config
    B, S = 2, 8
    Dx, Dc, Dh = 16, 8, 32          # x feat, strategy_num, hidden_dim
    imm, latent = 56, 8             # immediate_size, latent_size
    enc_hidden, dec_hidden, Dout = 32, 32, 16

    key = jax.random.PRNGKey(0)
    kx, kc, kt, ke, kp = jax.random.split(key, 5)
    x = jax.random.normal(kx, (B, S, Dx), dtype=jnp.float32)
    c = jax.random.normal(kc, (B, S, Dc), dtype=jnp.float32)
    context = jax.random.normal(kt, (B, S, Dh), dtype=jnp.float32)
    # reparameterization noise (torch.randn_like) generated outside the kernel
    eps = jax.random.normal(ke, (B, S, latent), dtype=jnp.float32)

    params = make_params(kp, Dx, Dc, Dh, imm, latent, enc_hidden, dec_hidden, Dout)

    fwd = jax.jit(functools.partial(cvae_forward, tile=512))
    recon, kld = fwd(x, c, context, eps, params)
    jax.block_until_ready((recon, kld))

    recon_ref, kld_ref = cvae_reference(x, c, context, eps, params)

    assert recon.shape == (B, S, Dout)
    assert bool(jnp.isfinite(recon).all()) and bool(jnp.isfinite(kld))
    assert bool((recon >= 0.0).all()) and bool((recon <= 1.0).all())
    # bf16 weights/activations -> loose tolerances against the f32 reference
    assert bool(jnp.allclose(recon, recon_ref, atol=5e-2, rtol=5e-2))
    assert float(jnp.abs(kld - kld_ref)) <= 0.1 + 0.05 * float(jnp.abs(kld_ref))
    print("KERNEL_OK")
</pallas_src>

<mosaic_0001>
module attributes {stable_mosaic.version = 11 : i64} {
  func.func @cvae_kernel(%arg0: i32, %arg1: memref<16x56xbf16, #tpu.memory_space<vmem>>, %arg2: memref<16x8xf32, #tpu.memory_space<vmem>>, %arg3: memref<56x32xbf16, #tpu.memory_space<vmem>>, %arg4: memref<1x32xf32, #tpu.memory_space<vmem>>, %arg5: memref<32x32xbf16, #tpu.memory_space<vmem>>, %arg6: memref<1x32xf32, #tpu.memory_space<vmem>>, %arg7: memref<32x16xbf16, #tpu.memory_space<vmem>>, %arg8: memref<1x16xf32, #tpu.memory_space<vmem>>, %arg9: memref<8x32xbf16, #tpu.memory_space<vmem>>, %arg10: memref<56x32xbf16, #tpu.memory_space<vmem>>, %arg11: memref<1x32xf32, #tpu.memory_space<vmem>>, %arg12: memref<32x16xbf16, #tpu.memory_space<vmem>>, %arg13: memref<1x16xf32, #tpu.memory_space<vmem>>, %arg14: memref<16x16xf32, #tpu.memory_space<vmem>>, %arg15: memref<16x1xf32, #tpu.memory_space<vmem>>) attributes {dimension_semantics = [#tpu.dimension_semantics<parallel>], iteration_bounds = array<i64: 1>, scalar_prefetch = 0 : i64, scratch_operands = 0 : i64, tpu.core_type = #tpu.core_type<tc>, window_params = [{transform_indices = @transform_0, window_bounds = array<i64: 16, 56>}, {transform_indices = @transform_1, window_bounds = array<i64: 16, 8>}, {pipeline_mode = #tpu.pipeline_mode<synchronous>, transform_indices = @transform_2, window_bounds = array<i64: 56, 32>}, {pipeline_mode = #tpu.pipeline_mode<synchronous>, transform_indices = @transform_3, window_bounds = array<i64: 1, 32>}, {pipeline_mode = #tpu.pipeline_mode<synchronous>, transform_indices = @transform_4, window_bounds = array<i64: 32, 32>}, {pipeline_mode = #tpu.pipeline_mode<synchronous>, transform_indices = @transform_5, window_bounds = array<i64: 1, 32>}, {pipeline_mode = #tpu.pipeline_mode<synchronous>, transform_indices = @transform_6, window_bounds = array<i64: 32, 16>}, {pipeline_mode = #tpu.pipeline_mode<synchronous>, transform_indices = @transform_7, window_bounds = array<i64: 1, 16>}, {pipeline_mode = #tpu.pipeline_mode<synchronous>, transform_indices = @transform_8, window_bounds = array<i64: 8, 32>}, {pipeline_mode = #tpu.pipeline_mode<synchronous>, transform_indices = @transform_9, window_bounds = array<i64: 56, 32>}, {pipeline_mode = #tpu.pipeline_mode<synchronous>, transform_indices = @transform_10, window_bounds = array<i64: 1, 32>}, {pipeline_mode = #tpu.pipeline_mode<synchronous>, transform_indices = @transform_11, window_bounds = array<i64: 32, 16>}, {pipeline_mode = #tpu.pipeline_mode<synchronous>, transform_indices = @transform_12, window_bounds = array<i64: 1, 16>}, {transform_indices = @transform_13, window_bounds = array<i64: 16, 16>}, {transform_indices = @transform_14, window_bounds = array<i64: 16, 1>}]} {
    %c0 = arith.constant 0 : index
    %c0_0 = arith.constant 0 : index
    %0 = vector.load %arg1[%c0, %c0_0] : memref<16x56xbf16, #tpu.memory_space<vmem>>, vector<16x56xbf16>
    %c0_1 = arith.constant 0 : index
    %c0_2 = arith.constant 0 : index
    %1 = vector.load %arg3[%c0_1, %c0_2] : memref<56x32xbf16, #tpu.memory_space<vmem>>, vector<56x32xbf16>
    %cst = arith.constant dense<0.000000e+00> : vector<16x32xf32>
    %2 = tpu.matmul %0, %1, %cst {dimension_numbers = #tpu.dot_dimension_numbers<[1], [0], [0], [1], [0, 0, 1, 1], [], []>} : vector<16x56xbf16>, vector<56x32xbf16>, vector<16x32xf32> -> vector<16x32xf32>
    %c0_3 = arith.constant 0 : index
    %c0_4 = arith.constant 0 : index
    %3 = vector.load %arg4[%c0_3, %c0_4] : memref<1x32xf32, #tpu.memory_space<vmem>>, vector<1x32xf32>
    %4 = vector.broadcast %3 : vector<1x32xf32> to vector<16x32xf32>
    %5 = arith.addf %2, %4 : vector<16x32xf32>
    %cst_5 = arith.constant 0.000000e+00 : f32
    %6 = vector.broadcast %cst_5 : f32 to vector<16x32xf32>
    %7 = arith.maximumf %5, %6 : vector<16x32xf32>
    %8 = arith.truncf %7 : vector<16x32xf32> to vector<16x32xbf16>
    %c0_6 = arith.constant 0 : index
    %c0_7 = arith.constant 0 : index
    %9 = vector.load %arg5[%c0_6, %c0_7] : memref<32x32xbf16, #tpu.memory_space<vmem>>, vector<32x32xbf16>
    %cst_8 = arith.constant dense<0.000000e+00> : vector<16x32xf32>
    %10 = tpu.matmul %8, %9, %cst_8 {dimension_numbers = #tpu.dot_dimension_numbers<[1], [0], [0], [1], [0, 0, 1, 1], [], []>} : vector<16x32xbf16>, vector<32x32xbf16>, vector<16x32xf32> -> vector<16x32xf32>
    %c0_9 = arith.constant 0 : index
    %c0_10 = arith.constant 0 : index
    %11 = vector.load %arg6[%c0_9, %c0_10] : memref<1x32xf32, #tpu.memory_space<vmem>>, vector<1x32xf32>
    %12 = vector.broadcast %11 : vector<1x32xf32> to vector<16x32xf32>
    %13 = arith.addf %10, %12 : vector<16x32xf32>
    %cst_11 = arith.constant 0.000000e+00 : f32
    %14 = vector.broadcast %cst_11 : f32 to vector<16x32xf32>
    %15 = arith.maximumf %13, %14 : vector<16x32xf32>
    %16 = arith.truncf %15 : vector<16x32xf32> to vector<16x32xbf16>
    %c0_12 = arith.constant 0 : index
    %c0_13 = arith.constant 0 : index
    %17 = vector.load %arg7[%c0_12, %c0_13] : memref<32x16xbf16, #tpu.memory_space<vmem>>, vector<32x16xbf16>
    %cst_14 = arith.constant dense<0.000000e+00> : vector<16x16xf32>
    %18 = tpu.matmul %16, %17, %cst_14 {dimension_numbers = #tpu.dot_dimension_numbers<[1], [0], [0], [1], [0, 0, 1, 1], [], []>} : vector<16x32xbf16>, vector<32x16xbf16>, vector<16x16xf32> -> vector<16x16xf32>
    %c0_15 = arith.constant 0 : index
    %c0_16 = arith.constant 0 : index
    %19 = vector.load %arg8[%c0_15, %c0_16] : memref<1x16xf32, #tpu.memory_space<vmem>>, vector<1x16xf32>
    %20 = vector.broadcast %19 : vector<1x16xf32> to vector<16x16xf32>
    %21 = arith.addf %18, %20 : vector<16x16xf32>
    %22 = vector.extract_strided_slice %21 {offsets = [0, 0], sizes = [16, 8], strides = [1, 1]} : vector<16x16xf32> to vector<16x8xf32>
    %23 = vector.extract_strided_slice %21 {offsets = [0, 8], sizes = [16, 8], strides = [1, 1]} : vector<16x16xf32> to vector<16x8xf32>
    %cst_17 = arith.constant 5.000000e-01 : f32
    %24 = vector.broadcast %cst_17 : f32 to vector<16x8xf32>
    %25 = arith.mulf %24, %23 : vector<16x8xf32>
    %26 = math.exp %25 : vector<16x8xf32>
    %c0_18 = arith.constant 0 : index
    %c0_19 = arith.constant 0 : index
    %27 = vector.load %arg2[%c0_18, %c0_19] : memref<16x8xf32, #tpu.memory_space<vmem>>, vector<16x8xf32>
    %28 = arith.mulf %26, %27 : vector<16x8xf32>
    %29 = arith.addf %22, %28 : vector<16x8xf32>
    %30 = arith.truncf %29 : vector<16x8xf32> to vector<16x8xbf16>
    %c0_20 = arith.constant 0 : index
    %c0_21 = arith.constant 0 : index
    %31 = vector.load %arg9[%c0_20, %c0_21] : memref<8x32xbf16, #tpu.memory_space<vmem>>, vector<8x32xbf16>
    %cst_22 = arith.constant dense<0.000000e+00> : vector<16x32xf32>
    %32 = tpu.matmul %30, %31, %cst_22 {dimension_numbers = #tpu.dot_dimension_numbers<[1], [0], [0], [1], [0, 0, 1, 1], [], []>} : vector<16x8xbf16>, vector<8x32xbf16>, vector<16x32xf32> -> vector<16x32xf32>
    %c0_23 = arith.constant 0 : index
    %c0_24 = arith.constant 0 : index
    %33 = vector.load %arg10[%c0_23, %c0_24] : memref<56x32xbf16, #tpu.memory_space<vmem>>, vector<56x32xbf16>
    %cst_25 = arith.constant dense<0.000000e+00> : vector<16x32xf32>
    %34 = tpu.matmul %0, %33, %cst_25 {dimension_numbers = #tpu.dot_dimension_numbers<[1], [0], [0], [1], [0, 0, 1, 1], [], []>} : vector<16x56xbf16>, vector<56x32xbf16>, vector<16x32xf32> -> vector<16x32xf32>
    %35 = arith.addf %32, %34 : vector<16x32xf32>
    %c0_26 = arith.constant 0 : index
    %c0_27 = arith.constant 0 : index
    %36 = vector.load %arg11[%c0_26, %c0_27] : memref<1x32xf32, #tpu.memory_space<vmem>>, vector<1x32xf32>
    %37 = vector.broadcast %36 : vector<1x32xf32> to vector<16x32xf32>
    %38 = arith.addf %35, %37 : vector<16x32xf32>
    %cst_28 = arith.constant 0.000000e+00 : f32
    %39 = vector.broadcast %cst_28 : f32 to vector<16x32xf32>
    %40 = arith.maximumf %38, %39 : vector<16x32xf32>
    %41 = arith.truncf %40 : vector<16x32xf32> to vector<16x32xbf16>
    %c0_29 = arith.constant 0 : index
    %c0_30 = arith.constant 0 : index
    %42 = vector.load %arg12[%c0_29, %c0_30] : memref<32x16xbf16, #tpu.memory_space<vmem>>, vector<32x16xbf16>
    %cst_31 = arith.constant dense<0.000000e+00> : vector<16x16xf32>
    %43 = tpu.matmul %41, %42, %cst_31 {dimension_numbers = #tpu.dot_dimension_numbers<[1], [0], [0], [1], [0, 0, 1, 1], [], []>} : vector<16x32xbf16>, vector<32x16xbf16>, vector<16x16xf32> -> vector<16x16xf32>
    %c0_32 = arith.constant 0 : index
    %c0_33 = arith.constant 0 : index
    %44 = vector.load %arg13[%c0_32, %c0_33] : memref<1x16xf32, #tpu.memory_space<vmem>>, vector<1x16xf32>
    %45 = vector.broadcast %44 : vector<1x16xf32> to vector<16x16xf32>
    %46 = arith.addf %43, %45 : vector<16x16xf32>
    %47 = arith.negf %46 : vector<16x16xf32>
    %48 = math.exp %47 : vector<16x16xf32>
    %cst_34 = arith.constant 1.000000e+00 : f32
    %49 = vector.broadcast %cst_34 : f32 to vector<16x16xf32>
    %50 = arith.addf %49, %48 : vector<16x16xf32>
    %51 = arith.divf %49, %50 : vector<16x16xf32>
    %c0_35 = arith.constant 0 : index
    %c0_36 = arith.constant 0 : index
    %52 = vector.load %arg14[%c0_35, %c0_36] : memref<16x16xf32, #tpu.memory_space<vmem>>, vector<16x16xf32>
    tpu.vector_store %arg14[%c0_35, %c0_36], %51 {strides = array<i32>} : memref<16x16xf32, #tpu.memory_space<vmem>>, vector<16x16xf32>,
    %cst_37 = arith.constant 1.000000e+00 : f32
    %53 = vector.broadcast %cst_37 : f32 to vector<16x8xf32>
    %54 = arith.addf %53, %23 : vector<16x8xf32>
    %55 = arith.mulf %22, %22 : vector<16x8xf32>
    %56 = arith.subf %54, %55 : vector<16x8xf32>
    %57 = arith.mulf %26, %26 : vector<16x8xf32>
    %58 = arith.subf %56, %57 : vector<16x8xf32>
    %cst_38 = arith.constant dense<0.000000e+00> : vector<16xf32>
    %59 = vector.multi_reduction <add>, %58, %cst_38 [1] : vector<16x8xf32> to vector<16xf32>
    %60 = vector.shape_cast %59 : vector<16xf32> to vector<16x1xf32>
    %c0_39 = arith.constant 0 : index
    %c0_40 = arith.constant 0 : index
    %61 = vector.load %arg15[%c0_39, %c0_40] : memref<16x1xf32, #tpu.memory_space<vmem>>, vector<16x1xf32>
    tpu.vector_store %arg15[%c0_39, %c0_40], %60 {strides = array<i32>} : memref<16x1xf32, #tpu.memory_space<vmem>>, vector<16x1xf32>,
    return
  }
  func.func @transform_0(%arg0: i32) -> (i32, i32) {
    %c0_i32 = arith.constant 0 : i32
    %c0_i32_0 = arith.constant 0 : i32
    return %arg0, %c0_i32 : i32, i32
  }
  func.func @transform_1(%arg0: i32) -> (i32, i32) {
    %c0_i32 = arith.constant 0 : i32
    %c0_i32_0 = arith.constant 0 : i32
    return %arg0, %c0_i32 : i32, i32
  }
  func.func @transform_2(%arg0: i32) -> (i32, i32) {
    %c0_i32 = arith.constant 0 : i32
    %c0_i32_0 = arith.constant 0 : i32
    %c0_i32_1 = arith.constant 0 : i32
    return %c0_i32, %c0_i32_0 : i32, i32
  }
  func.func @transform_3(%arg0: i32) -> (i32, i32) {
    %c0_i32 = arith.constant 0 : i32
    %c0_i32_0 = arith.constant 0 : i32
    %c0_i32_1 = arith.constant 0 : i32
    return %c0_i32, %c0_i32_0 : i32, i32
  }
  func.func @transform_4(%arg0: i32) -> (i32, i32) {
    %c0_i32 = arith.constant 0 : i32
    %c0_i32_0 = arith.constant 0 : i32
    %c0_i32_1 = arith.constant 0 : i32
    return %c0_i32, %c0_i32_0 : i32, i32
  }
  func.func @transform_5(%arg0: i32) -> (i32, i32) {
    %c0_i32 = arith.constant 0 : i32
    %c0_i32_0 = arith.constant 0 : i32
    %c0_i32_1 = arith.constant 0 : i32
    return %c0_i32, %c0_i32_0 : i32, i32
  }
  func.func @transform_6(%arg0: i32) -> (i32, i32) {
    %c0_i32 = arith.constant 0 : i32
    %c0_i32_0 = arith.constant 0 : i32
    %c0_i32_1 = arith.constant 0 : i32
    return %c0_i32, %c0_i32_0 : i32, i32
  }
  func.func @transform_7(%arg0: i32) -> (i32, i32) {
    %c0_i32 = arith.constant 0 : i32
    %c0_i32_0 = arith.constant 0 : i32
    %c0_i32_1 = arith.constant 0 : i32
    return %c0_i32, %c0_i32_0 : i32, i32
  }
  func.func @transform_8(%arg0: i32) -> (i32, i32) {
    %c0_i32 = arith.constant 0 : i32
    %c0_i32_0 = arith.constant 0 : i32
    %c0_i32_1 = arith.constant 0 : i32
    return %c0_i32, %c0_i32_0 : i32, i32
  }
  func.func @transform_9(%arg0: i32) -> (i32, i32) {
    %c0_i32 = arith.constant 0 : i32
    %c0_i32_0 = arith.constant 0 : i32
    %c0_i32_1 = arith.constant 0 : i32
    return %c0_i32, %c0_i32_0 : i32, i32
  }
  func.func @transform_10(%arg0: i32) -> (i32, i32) {
    %c0_i32 = arith.constant 0 : i32
    %c0_i32_0 = arith.constant 0 : i32
    %c0_i32_1 = arith.constant 0 : i32
    return %c0_i32, %c0_i32_0 : i32, i32
  }
  func.func @transform_11(%arg0: i32) -> (i32, i32) {
    %c0_i32 = arith.constant 0 : i32
    %c0_i32_0 = arith.constant 0 : i32
    %c0_i32_1 = arith.constant 0 : i32
    return %c0_i32, %c0_i32_0 : i32, i32
  }
  func.func @transform_12(%arg0: i32) -> (i32, i32) {
    %c0_i32 = arith.constant 0 : i32
    %c0_i32_0 = arith.constant 0 : i32
    %c0_i32_1 = arith.constant 0 : i32
    return %c0_i32, %c0_i32_0 : i32, i32
  }
  func.func @transform_13(%arg0: i32) -> (i32, i32) {
    %c0_i32 = arith.constant 0 : i32
    %c0_i32_0 = arith.constant 0 : i32
    return %arg0, %c0_i32 : i32, i32
  }
  func.func @transform_14(%arg0: i32) -> (i32, i32) {
    %c0_i32 = arith.constant 0 : i32
    %c0_i32_0 = arith.constant 0 : i32
    return %arg0, %c0_i32 : i32, i32
  }
}

</mosaic_0001>

<llo_original>
// kernel: cvae_forward.1
$region0: #{cvae_forward.1}
  #allocation0 [shape = 'u32[]', space=smem, size = 0x4, offset = 0x4, fixed_abs, tag = 'smem constant byte address 0x4 - core index']
  #allocation1 [shape = 'u32[144,128]{1,0:T(1,128)}', space=vmem, size = 0x12000, scoped, tag = 'internal scratch']
  %s0 = inlined_call_operand.vmem [shape: bf16[16,56], index: 0, kind: input, shape index: {}]
  %s1 = inlined_call_operand.vmem [shape: f32[16,8], index: 1, kind: input, shape index: {}]
  %s2 = inlined_call_operand.vmem [shape: bf16[56,32], index: 2, kind: input, shape index: {}]
  %s3 = inlined_call_operand.vmem [shape: f32[1,32], index: 3, kind: input, shape index: {}]
  %s4 = inlined_call_operand.vmem [shape: bf16[32,32], index: 4, kind: input, shape index: {}]
  %s5 = inlined_call_operand.vmem [shape: f32[1,32], index: 5, kind: input, shape index: {}]
  %s6 = inlined_call_operand.vmem [shape: bf16[32,16], index: 6, kind: input, shape index: {}]
  %s7 = inlined_call_operand.vmem [shape: f32[1,16], index: 7, kind: input, shape index: {}]
  %s8 = inlined_call_operand.vmem [shape: bf16[8,32], index: 8, kind: input, shape index: {}]
  %s9 = inlined_call_operand.vmem [shape: bf16[56,32], index: 9, kind: input, shape index: {}]
  %s10 = inlined_call_operand.vmem [shape: f32[1,32], index: 10, kind: input, shape index: {}]
  %s11 = inlined_call_operand.vmem [shape: bf16[32,16], index: 11, kind: input, shape index: {}]
  %s12 = inlined_call_operand.vmem [shape: f32[1,16], index: 12, kind: input, shape index: {}]
  %s13 = inlined_call_operand.hbm [shape: f32[16,16], index: 13, kind: output, shape index: {0}]
  %s14 = inlined_call_operand.vmem [shape: f32[16,1], index: 14, kind: output, shape index: {1}]
  %15 = xla_tuple %s13, %s14
  %s16 = sld [smem:[#allocation0]]
  $region70: #{cvae_forward.1} parent=0
    _
  %s18 = ssub.s32 1, %s16
  %s19 = scalar_select 0, %s18, %s16
  $region1: #{cvae_forward.1} parent=0
    #allocation2 [shape = 'u8[8192]{0}', space=vmem, size = 0x2000, scoped, tag = 'output window, operand 0, single buffered']
    #allocation3 [shape = 's32[1]{0}', space=sflag, size = 0x4, scoped, tag = 'scoped memory for cvae_forward.1']
    %20 = vsyncpa [#allocation3], 0
    // Predicated region
    $region2: #{cvae_forward.1} parent=1 // pred_check
      _
    $region3: #{cvae_forward.1} parent=1 // pred_check_branch
      %22 = sbr.rel (0) target = $region5
    $region4: #{cvae_forward.1} parent=1 // pred_region
      _
    $region5: #{cvae_forward.1} parent=1 // pred_fallthru
      _
    // Predicated region
    $region6: #{cvae_forward.1} parent=1 // pred_check
      _
    $region7: #{cvae_forward.1} parent=1 // pred_check_branch
      %24 = sbr.rel (0) target = $region9
    $region8: #{cvae_forward.1} parent=1 // pred_region
      _
    $region9: #{cvae_forward.1} parent=1 // pred_fallthru
      _
    // Predicated region
    $region10: #{cvae_forward.1} parent=1 // pred_check
      _
    $region11: #{cvae_forward.1} parent=1 // pred_check_branch
      %26 = sbr.rel (0) target = $region13
    $region12: #{cvae_forward.1} parent=1 // pred_region
      _
    $region13: #{cvae_forward.1} parent=1 // pred_fallthru
      _
    // Predicated region
    $region14: #{cvae_forward.1} parent=1 // pred_check
      _
    $region15: #{cvae_forward.1} parent=1 // pred_check_branch
      %28 = sbr.rel (0) target = $region17
    $region16: #{cvae_forward.1} parent=1 // pred_region
      _
    $region17: #{cvae_forward.1} parent=1 // pred_fallthru
      _
    // Predicated region
    $region18: #{cvae_forward.1} parent=1 // pred_check
      _
    $region19: #{cvae_forward.1} parent=1 // pred_check_branch
      %30 = sbr.rel (0) target = $region21
    $region20: #{cvae_forward.1} parent=1 // pred_region
      _
    $region21: #{cvae_forward.1} parent=1 // pred_fallthru
      _
    // Predicated region
    $region22: #{cvae_forward.1} parent=1 // pred_check
      _
    $region23: #{cvae_forward.1} parent=1 // pred_check_branch
      %32 = sbr.rel (0) target = $region25
    $region24: #{cvae_forward.1} parent=1 // pred_region
      _
    $region25: #{cvae_forward.1} parent=1 // pred_fallthru
      _
    // Predicated region
    $region26: #{cvae_forward.1} parent=1 // pred_check
      _
    $region27: #{cvae_forward.1} parent=1 // pred_check_branch
      %34 = sbr.rel (0) target = $region29
    $region28: #{cvae_forward.1} parent=1 // pred_region
      _
    $region29: #{cvae_forward.1} parent=1 // pred_fallthru
      _
    // Predicated region
    $region30: #{cvae_forward.1} parent=1 // pred_check
      _
    $region31: #{cvae_forward.1} parent=1 // pred_check_branch
      %36 = sbr.rel (0) target = $region33
    $region32: #{cvae_forward.1} parent=1 // pred_region
      _
    $region33: #{cvae_forward.1} parent=1 // pred_fallthru
      _
    // Predicated region
    $region34: #{cvae_forward.1} parent=1 // pred_check
      _
    $region35: #{cvae_forward.1} parent=1 // pred_check_branch
      %38 = sbr.rel (0) target = $region37
    $region36: #{cvae_forward.1} parent=1 // pred_region
      _
    $region37: #{cvae_forward.1} parent=1 // pred_fallthru
      _
    // Predicated region
    $region38: #{cvae_forward.1} parent=1 // pred_check
      _
    $region39: #{cvae_forward.1} parent=1 // pred_check_branch
      %40 = sbr.rel (0) target = $region41
    $region40: #{cvae_forward.1} parent=1 // pred_region
      _
    $region41: #{cvae_forward.1} parent=1 // pred_fallthru
      _
    // Predicated region
    $region42: #{cvae_forward.1} parent=1 // pred_check
      _
    $region43: #{cvae_forward.1} parent=1 // pred_check_branch
      %42 = sbr.rel (0) target = $region45
    $region44: #{cvae_forward.1} parent=1 // pred_region
      _
    $region45: #{cvae_forward.1} parent=1 // pred_fallthru
      _
    // Predicated region
    $region46: #{cvae_forward.1} parent=1 // pred_check
      _
    $region47: #{cvae_forward.1} parent=1 // pred_check_branch
      %44 = sbr.rel (0) target = $region49
    $region48: #{cvae_forward.1} parent=1 // pred_region
      _
    $region49: #{cvae_forward.1} parent=1 // pred_fallthru
      _
    // Predicated region
    $region50: #{cvae_forward.1} parent=1 // pred_check
      _
    $region51: #{cvae_forward.1} parent=1 // pred_check_branch
      %46 = sbr.rel (0) target = $region53
    $region52: #{cvae_forward.1} parent=1 // pred_region
      _
    $region53: #{cvae_forward.1} parent=1 // pred_fallthru
      _
    %v48 = vld [vmem:[%s0] sm:$0xf]
    %v49 = vld [vmem:[%s0 + $0x4] sm:$0xf]
    %v50 = vld [vmem:[%s2] sm:$0xf]
    %v51 = vld [vmem:[%s2 + $0x4] sm:$0xf]
    %v52 = vld [vmem:[%s2 + $0x8] sm:$0xf]
    %v53 = vld [vmem:[%s2 + $0xc] sm:$0xf]
    %v54 = vld [vmem:[%s2 + $0x10] sm:$0xf]
    %v55 = vld [vmem:[%s2 + $0x14] sm:$0xf]
    %v56 = vld [vmem:[%s2 + $0x18] sm:$0xf]
    %v57 = vld [vmem:[%s3] sm:$0x1]
    %v59 = vlaneseq
    %v60 = vshrl.u32 %v59, 7
    %v61 = vsub.s32 0, %v60
    %v62 = vrot.slane %v57, %v61
    %v66 = vunpack.c.l.b16 %v48
    %v67 = vunpack.c.l.b16 %v49
    %v68 = vpack.c.b16 %v67, %v66
    %v76 = vunpack.c.l.b16 %v50
    %v77 = vunpack.c.l.b16 %v51
    %v78 = vunpack.c.l.b16 %v52
    %v79 = vunpack.c.l.b16 %v53
    %v80 = vunpack.c.l.b16 %v54
    %v81 = vunpack.c.l.b16 %v55
    %v82 = vunpack.c.l.b16 %v56
    %v83 = vpack.c.b16 %v77, %v76
    %v84 = vpack.c.b16 %v79, %v78
    %v85 = vpack.c.b16 %v81, %v80
    %v86 = vpack.c.b16 %v82, %v82
    %vm90 = vcmask 457728
    %v92 = vsel %vm90, %v68, 0
    %vm94 = vcmask 1043456
    %v96 = vsel %vm94, %v86, 0
    %98 = vmatprep.subr.bf16.mxu0 0
    %99 = vmatpush1.bf16.msra.mxu0 0
    %100 = vmatprep.subr.bf16.mxu0 0
    %101 = vmatpush1.bf16.msra.mxu0 0
    %102 = vmatprep.subr.bf16.mxu0 0
    %103 = vmatpush1.bf16.msra.mxu0 0
    %104 = vmatprep.subr.bf16.mxu0 0
    %105 = vmatpush1.bf16.msra.mxu0 0
    %106 = vmatprep.subr.bf16.mxu0 0
    %107 = vmatpush1.bf16.msra.mxu0 %v96
    %108 = vmatprep.subr.bf16.mxu0 0
    %109 = vmatpush1.bf16.msra.mxu0 %v85
    %110 = vmatprep.subr.bf16.mxu0 0
    %111 = vmatpush1.bf16.msra.mxu0 %v84
    %112 = vmatprep.subr.bf16.mxu0 0
    %113 = vmatpush1.bf16.msra.mxu0 %v83
    %114 = vmatprep.subr.bf16.mxu0 0
    %115 = vmatpush2.bf16.msra.mxu0 0
    %116 = vmatprep.subr.bf16.mxu0 0
    %117 = vmatpush2.bf16.msra.mxu0 0
    %118 = vmatprep.subr.bf16.mxu0 0
    %119 = vmatpush2.bf16.msra.mxu0 0
    %120 = vmatprep.subr.bf16.mxu0 0
    %121 = vmatpush2.bf16.msra.mxu0 0
    %122 = vmatprep.subr.bf16.mxu0 0
    %123 = vmatpush2.bf16.msra.mxu0 0
    %124 = vmatprep.subr.bf16.mxu0 0
    %125 = vmatpush2.bf16.msra.mxu0 0
    %126 = vmatprep.subr.bf16.mxu0 0
    %127 = vmatpush2.bf16.msra.mxu0 0
    %128 = vmatprep.subr.bf16.mxu0 0
    %129 = vmatpush2.bf16.msra.mxu0 0
    %130 = vmatprep.mubr.bf16.mxu0 0
    %131 = vmatmul.mubr.bf16.gmra.mxu0 %v92
    %v132 = vpop.f32.mrf.mxu0
    %v133 = vadd.f32 %v62, %v132
    %v134 = vpop.f32.mrf.mxu0
    %v135 = vpop.f32.mrf.mxu0
    %v136 = vadd.f32 %v62, %v135
    %v137 = vpop.f32.mrf.mxu0
    %138 = vdwg.mxu0
    %v139 = vmax.f32 %v133, 0.0
    %v140 = vmax.f32 %v136, 0.0
    %v141 = vpack.c.bf16 %v140, %v139
    %v142 = vld [vmem:[%s4] sm:$0xf]
    %v143 = vld [vmem:[%s4 + $0x4] sm:$0xf]
    %v144 = vld [vmem:[%s4 + $0x8] sm:$0xf]
    %v145 = vld [vmem:[%s4 + $0xc] sm:$0xf]
    %v146 = vld [vmem:[%s5] sm:$0x1]
    %v148 = vlaneseq
    %v149 = vshrl.u32 %v148, 7
    %v150 = vsub.s32 0, %v149
    %v151 = vrot.slane %v146, %v150
    %v157 = vunpack.c.l.b16 %v142
    %v158 = vunpack.c.l.b16 %v143
    %v159 = vunpack.c.l.b16 %v144
    %v160 = vunpack.c.l.b16 %v145
    %v161 = vpack.c.b16 %v158, %v157
    %v162 = vpack.c.b16 %v160, %v159
    %vm165 = vcmask 261120
    %v167 = vsel %vm165, %v141, 0
    %169 = vmatprep.subr.bf16.mxu0 0
    %170 = vmatpush1.bf16.msra.mxu0 0
    %171 = vmatprep.subr.bf16.mxu0 0
    %172 = vmatpush1.bf16.msra.mxu0 0
    %173 = vmatprep.subr.bf16.mxu0 0
    %174 = vmatpush1.bf16.msra.mxu0 0
    %175 = vmatprep.subr.bf16.mxu0 0
    %176 = vmatpush1.bf16.msra.mxu0 0
    %177 = vmatprep.subr.bf16.mxu0 0
    %178 = vmatpush1.bf16.msra.mxu0 0
    %179 = vmatprep.subr.bf16.mxu0 0
    %180 = vmatpush1.bf16.msra.mxu0 0
    %181 = vmatprep.subr.bf16.mxu0 0
    %182 = vmatpush1.bf16.msra.mxu0 %v162
    %183 = vmatprep.subr.bf16.mxu0 0
    %184 = vmatpush1.bf16.msra.mxu0 %v161
    %185 = vmatprep.subr.bf16.mxu0 0
    %186 = vmatpush2.bf16.msra.mxu0 0
    %187 = vmatprep.subr.bf16.mxu0 0
    %188 = vmatpush2.bf16.msra.mxu0 0
    %189 = vmatprep.subr.bf16.mxu0 0
    %190 = vmatpush2.bf16.msra.mxu0 0
    %191 = vmatprep.subr.bf16.mxu0 0
    %192 = vmatpush2.bf16.msra.mxu0 0
    %193 = vmatprep.subr.bf16.mxu0 0
    %194 = vmatpush2.bf16.msra.mxu0 0
    %195 = vmatprep.subr.bf16.mxu0 0
    %196 = vmatpush2.bf16.msra.mxu0 0
    %197 = vmatprep.subr.bf16.mxu0 0
    %198 = vmatpush2.bf16.msra.mxu0 0
    %199 = vmatprep.subr.bf16.mxu0 0
    %200 = vmatpush2.bf16.msra.mxu0 0
    %201 = vmatprep.mubr.bf16.mxu0 0
    %202 = vmatmul.mubr.bf16.gmra.mxu0 %v167
    %v203 = vpop.f32.mrf.mxu0
    %v204 = vadd.f32 %v151, %v203
    %v205 = vpop.f32.mrf.mxu0
    %v206 = vpop.f32.mrf.mxu0
    %v207 = vadd.f32 %v151, %v206
    %v208 = vpop.f32.mrf.mxu0
    %209 = vdwg.mxu0
    %v210 = vmax.f32 %v204, 0.0
    %v211 = vmax.f32 %v207, 0.0
    %v212 = vpack.c.bf16 %v211, %v210
    %v213 = vld [vmem:[%s6] sm:$0xf]
    %v214 = vld [vmem:[%s6 + $0x4] sm:$0xf]
    %v215 = vld [vmem:[%s6 + $0x8] sm:$0xf]
    %v216 = vld [vmem:[%s6 + $0xc] sm:$0xf]
    %v217 = vld [vmem:[%s7] sm:$0x1]
    %v219 = vlaneseq
    %v220 = vshrl.u32 %v219, 7
    %v221 = vsub.s32 0, %v220
    %v222 = vrot.slane %v217, %v221
    %v228 = vunpack.c.l.b16 %v213
    %v229 = vunpack.c.l.b16 %v214
    %v230 = vunpack.c.l.b16 %v215
    %v231 = vunpack.c.l.b16 %v216
    %v232 = vpack.c.b16 %v229, %v228
    %v233 = vpack.c.b16 %v231, %v230
    %v237 = vsel %vm165, %v212, 0
    %239 = vmatprep.subr.bf16.mxu0 0
    %240 = vmatpush1.bf16.msra.mxu0 0
    %241 = vmatprep.subr.bf16.mxu0 0
    %242 = vmatpush1.bf16.msra.mxu0 0
    %243 = vmatprep.subr.bf16.mxu0 0
    %244 = vmatpush1.bf16.msra.mxu0 0
    %245 = vmatprep.subr.bf16.mxu0 0
    %246 = vmatpush1.bf16.msra.mxu0 0
    %247 = vmatprep.subr.bf16.mxu0 0
    %248 = vmatpush1.bf16.msra.mxu0 0
    %249 = vmatprep.subr.bf16.mxu0 0
    %250 = vmatpush1.bf16.msra.mxu0 0
    %251 = vmatprep.subr.bf16.mxu0 0
    %252 = vmatpush1.bf16.msra.mxu0 %v233
    %253 = vmatprep.subr.bf16.mxu0 0
    %254 = vmatpush1.bf16.msra.mxu0 %v232
    %255 = vmatprep.subr.bf16.mxu0 0
    %256 = vmatpush2.bf16.msra.mxu0 0
    %257 = vmatprep.subr.bf16.mxu0 0
    %258 = vmatpush2.bf16.msra.mxu0 0
    %259 = vmatprep.subr.bf16.mxu0 0
    %260 = vmatpush2.bf16.msra.mxu0 0
    %261 = vmatprep.subr.bf16.mxu0 0
    %262 = vmatpush2.bf16.msra.mxu0 0
    %263 = vmatprep.subr.bf16.mxu0 0
    %264 = vmatpush2.bf16.msra.mxu0 0
    %265 = vmatprep.subr.bf16.mxu0 0
    %266 = vmatpush2.bf16.msra.mxu0 0
    %267 = vmatprep.subr.bf16.mxu0 0
    %268 = vmatpush2.bf16.msra.mxu0 0
    %269 = vmatprep.subr.bf16.mxu0 0
    %270 = vmatpush2.bf16.msra.mxu0 0
    %271 = vmatprep.mubr.bf16.mxu0 0
    %272 = vmatmul.mubr.bf16.gmra.mxu0 %v237
    %v273 = vpop.f32.mrf.mxu0
    %v274 = vadd.f32 %v222, %v273
    %v275 = vpop.f32.mrf.mxu0
    %v276 = vpop.f32.mrf.mxu0
    %v277 = vadd.f32 %v222, %v276
    %v278 = vpop.f32.mrf.mxu0
    %279 = vdwg.mxu0
    %v280 = vmul.f32 %v274, 0.5
    %v281 = vmul.f32 %v277, 0.5
    %v282 = vmul.f32 %v280, 1.442695
    %v283 = vpow.pop %v282
    %v284 = vmul.f32 %v281, 1.442695
    %v285 = vpow.pop %v284
    %v286 = vld [vmem:[%s1] sm:$0xff]
    %v287 = vld [vmem:[%s1 + $0x8] sm:$0xff]
    %290 = vrot.lane.b32.xlu0 %v286, 8
    %v291 = vpop.permute.xlu0 %290
    %292 = vrot.lane.b32.xlu0 %v287, 8
    %v293 = vpop.permute.xlu0 %292
    %v296 = vmul.f32 %v283, %v291
    %v297 = vmul.f32 %v285, %v293
    %300 = vrot.lane.b32.xlu0 %v296, 120
    %v301 = vpop.permute.xlu0 %300
    %302 = vrot.lane.b32.xlu0 %v297, 120
    %v303 = vpop.permute.xlu0 %302
    %v306 = vadd.f32 %v274, %v301
    %v307 = vadd.f32 %v277, %v303
    %v308 = vpack.c.bf16 %v307, %v306
    %v309 = vld [vmem:[%s8] sm:$0xf]
    %v310 = vld [vmem:[%s9] sm:$0xf]
    %v311 = vld [vmem:[%s9 + $0x4] sm:$0xf]
    %v312 = vld [vmem:[%s9 + $0x8] sm:$0xf]
    %v313 = vld [vmem:[%s9 + $0xc] sm:$0xf]
    %v314 = vld [vmem:[%s9 + $0x10] sm:$0xf]
    %v315 = vld [vmem:[%s9 + $0x14] sm:$0xf]
    %v316 = vld [vmem:[%s9 + $0x18] sm:$0xf]
    %v324 = vunpack.c.l.b16 %v310
    %v325 = vunpack.c.l.b16 %v311
    %v326 = vunpack.c.l.b16 %v312
    %v327 = vunpack.c.l.b16 %v313
    %v328 = vunpack.c.l.b16 %v314
    %v329 = vunpack.c.l.b16 %v315
    %v330 = vunpack.c.l.b16 %v316
    %v331 = vpack.c.b16 %v325, %v324
    %v332 = vpack.c.b16 %v327, %v326
    %v333 = vpack.c.b16 %v329, %v328
    %v334 = vpack.c.b16 %v330, %v330
    %v339 = vsel %vm94, %v334, 0
    %341 = vmatprep.subr.bf16.mxu0 0
    %342 = vmatpush1.bf16.msra.mxu0 0
    %343 = vmatprep.subr.bf16.mxu0 0
    %344 = vmatpush1.bf16.msra.mxu0 0
    %345 = vmatprep.subr.bf16.mxu0 0
    %346 = vmatpush1.bf16.msra.mxu0 0
    %347 = vmatprep.subr.bf16.mxu0 0
    %348 = vmatpush1.bf16.msra.mxu0 0
    %349 = vmatprep.subr.bf16.mxu0 0
    %350 = vmatpush1.bf16.msra.mxu0 %v339
    %351 = vmatprep.subr.bf16.mxu0 0
    %352 = vmatpush1.bf16.msra.mxu0 %v333
    %353 = vmatprep.subr.bf16.mxu0 0
    %354 = vmatpush1.bf16.msra.mxu0 %v332
    %355 = vmatprep.subr.bf16.mxu0 0
    %356 = vmatpush1.bf16.msra.mxu0 %v331
    %357 = vmatprep.subr.bf16.mxu0 0
    %358 = vmatpush2.bf16.msra.mxu0 0
    %359 = vmatprep.subr.bf16.mxu0 0
    %360 = vmatpush2.bf16.msra.mxu0 0
    %361 = vmatprep.subr.bf16.mxu0 0
    %362 = vmatpush2.bf16.msra.mxu0 0
    %363 = vmatprep.subr.bf16.mxu0 0
    %364 = vmatpush2.bf16.msra.mxu0 0
    %365 = vmatprep.subr.bf16.mxu0 0
    %366 = vmatpush2.bf16.msra.mxu0 0
    %367 = vmatprep.subr.bf16.mxu0 0
    %368 = vmatpush2.bf16.msra.mxu0 0
    %369 = vmatprep.subr.bf16.mxu0 0
    %370 = vmatpush2.bf16.msra.mxu0 0
    %371 = vmatprep.subr.bf16.mxu0 0
    %372 = vmatpush2.bf16.msra.mxu0 0
    %373 = vmatprep.mubr.bf16.mxu0 0
    %374 = vmatmul.mubr.bf16.gmra.mxu0 %v92
    %v375 = vpop.f32.mrf.mxu0
    %v376 = vadd.f32 0.0, %v375
    %v377 = vpop.f32.mrf.mxu0
    %v378 = vpop.f32.mrf.mxu0
    %v379 = vadd.f32 0.0, %v378
    %v380 = vpop.f32.mrf.mxu0
    %381 = vdwg.mxu0
    %vm382 = vcmask 64512
    %v384 = vsel %vm382, %v308, 0
    %v387 = vsel %vm94, %v309, 0
    %389 = vmatprep.subr.bf16.mxu0 0
    %390 = vmatpush1.bf16.msra.mxu0 0
    %391 = vmatprep.subr.bf16.mxu0 0
    %392 = vmatpush1.bf16.msra.mxu0 0
    %393 = vmatprep.subr.bf16.mxu0 0
    %394 = vmatpush1.bf16.msra.mxu0 0
    %395 = vmatprep.subr.bf16.mxu0 0
    %396 = vmatpush1.bf16.msra.mxu0 0
    %397 = vmatprep.subr.bf16.mxu0 0
    %398 = vmatpush1.bf16.msra.mxu0 0
    %399 = vmatprep.subr.bf16.mxu0 0
    %400 = vmatpush1.bf16.msra.mxu0 0
    %401 = vmatprep.subr.bf16.mxu0 0
    %402 = vmatpush1.bf16.msra.mxu0 0
    %403 = vmatprep.subr.bf16.mxu0 0
    %404 = vmatpush1.bf16.msra.mxu0 %v387
    %405 = vmatprep.subr.bf16.mxu0 0
    %406 = vmatpush2.bf16.msra.mxu0 0
    %407 = vmatprep.subr.bf16.mxu0 0
    %408 = vmatpush2.bf16.msra.mxu0 0
    %409 = vmatprep.subr.bf16.mxu0 0
    %410 = vmatpush2.bf16.msra.mxu0 0
    %411 = vmatprep.subr.bf16.mxu0 0
    %412 = vmatpush2.bf16.msra.mxu0 0
    %413 = vmatprep.subr.bf16.mxu0 0
    %414 = vmatpush2.bf16.msra.mxu0 0
    %415 = vmatprep.subr.bf16.mxu0 0
    %416 = vmatpush2.bf16.msra.mxu0 0
    %417 = vmatprep.subr.bf16.mxu0 0
    %418 = vmatpush2.bf16.msra.mxu0 0
    %419 = vmatprep.subr.bf16.mxu0 0
    %420 = vmatpush2.bf16.msra.mxu0 0
    %421 = vmatprep.mubr.bf16.mxu0 0
    %422 = vmatmul.mubr.bf16.gmra.mxu0 %v384
    %v423 = vpop.f32.mrf.mxu0
    %v424 = vadd.f32 %v376, %v423
    %v425 = vpop.f32.mrf.mxu0
    %v426 = vpop.f32.mrf.mxu0
    %v427 = vadd.f32 %v379, %v426
    %v428 = vpop.f32.mrf.mxu0
    %429 = vdwg.mxu0
    %v430 = vld [vmem:[%s10] sm:$0x1]
    %v432 = vlaneseq
    %v433 = vshrl.u32 %v432, 7
    %v434 = vsub.s32 0, %v433
    %v435 = vrot.slane %v430, %v434
    %v437 = vadd.f32 %v424, %v435
    %v438 = vadd.f32 %v427, %v435
    %v439 = vmax.f32 %v437, 0.0
    %v440 = vmax.f32 %v438, 0.0
    %v441 = vpack.c.bf16 %v440, %v439
    %v442 = vld [vmem:[%s11] sm:$0xf]
    %v443 = vld [vmem:[%s11 + $0x4] sm:$0xf]
    %v444 = vld [vmem:[%s11 + $0x8] sm:$0xf]
    %v445 = vld [vmem:[%s11 + $0xc] sm:$0xf]
    %v446 = vld [vmem:[%s12] sm:$0x1]
    %v448 = vlaneseq
    %v449 = vshrl.u32 %v448, 7
    %v450 = vsub.s32 0, %v449
    %v451 = vrot.slane %v446, %v450
    %v457 = vunpack.c.l.b16 %v442
    %v458 = vunpack.c.l.b16 %v443
    %v459 = vunpack.c.l.b16 %v444
    %v460 = vunpack.c.l.b16 %v445
    %v461 = vpack.c.b16 %v458, %v457
    %v462 = vpack.c.b16 %v460, %v459
    %v466 = vsel %vm165, %v441, 0
    %468 = vmatprep.subr.bf16.mxu0 0
    %469 = vmatpush1.bf16.msra.mxu0 0
    %470 = vmatprep.subr.bf16.mxu0 0
    %471 = vmatpush1.bf16.msra.mxu0 0
    %472 = vmatprep.subr.bf16.mxu0 0
    %473 = vmatpush1.bf16.msra.mxu0 0
    %474 = vmatprep.subr.bf16.mxu0 0
    %475 = vmatpush1.bf16.msra.mxu0 0
    %476 = vmatprep.subr.bf16.mxu0 0
    %477 = vmatpush1.bf16.msra.mxu0 0
    %478 = vmatprep.subr.bf16.mxu0 0
    %479 = vmatpush1.bf16.msra.mxu0 0
    %480 = vmatprep.subr.bf16.mxu0 0
    %481 = vmatpush1.bf16.msra.mxu0 %v462
    %482 = vmatprep.subr.bf16.mxu0 0
    %483 = vmatpush1.bf16.msra.mxu0 %v461
    %484 = vmatprep.subr.bf16.mxu0 0
    %485 = vmatpush2.bf16.msra.mxu0 0
    %486 = vmatprep.subr.bf16.mxu0 0
    %487 = vmatpush2.bf16.msra.mxu0 0
    %488 = vmatprep.subr.bf16.mxu0 0
    %489 = vmatpush2.bf16.msra.mxu0 0
    %490 = vmatprep.subr.bf16.mxu0 0
    %491 = vmatpush2.bf16.msra.mxu0 0
    %492 = vmatprep.subr.bf16.mxu0 0
    %493 = vmatpush2.bf16.msra.mxu0 0
    %494 = vmatprep.subr.bf16.mxu0 0
    %495 = vmatpush2.bf16.msra.mxu0 0
    %496 = vmatprep.subr.bf16.mxu0 0
    %497 = vmatpush2.bf16.msra.mxu0 0
    %498 = vmatprep.subr.bf16.mxu0 0
    %499 = vmatpush2.bf16.msra.mxu0 0
    %500 = vmatprep.mubr.bf16.mxu0 0
    %501 = vmatmul.mubr.bf16.gmra.mxu0 %v466
    %v502 = vpop.f32.mrf.mxu0
    %v503 = vadd.f32 %v451, %v502
    %v504 = vpop.f32.mrf.mxu0
    %v505 = vpop.f32.mrf.mxu0
    %v506 = vadd.f32 %v451, %v505
    %v507 = vpop.f32.mrf.mxu0
    %508 = vdwg.mxu0
    %v509 = vxor.u32 %v503, 2147483648
    %v510 = vxor.u32 %v506, 2147483648
    %v511 = vmul.f32 %v509, 1.442695
    %v512 = vpow.pop %v511
    %v513 = vmul.f32 %v510, 1.442695
    %v514 = vpow.pop %v513
    %v515 = vadd.f32 %v512, 1.0
    %v516 = vadd.f32 %v514, 1.0
    %v517 = vrcp.pop %v515
    %v518 = vmul.f32 1.0, %v517
    %v519 = vrcp.pop %v516
    %v520 = vmul.f32 1.0, %v519
    %vm521 = vcmask 130048
    %522 = vst.msk [vmem:[#allocation2] sm:$0xff] %vm521, %v518
    %523 = vst.msk [vmem:[#allocation2 + $0x8] sm:$0xff] %vm521, %v520
    %v524 = vadd.f32 %v274, 1.0
    %v525 = vadd.f32 %v277, 1.0
    %v526 = vmul.f32 %v274, %v274
    %v527 = vmul.f32 %v277, %v277
    %530 = vrot.lane.b32.xlu0 %v526, 8
    %v531 = vpop.permute.xlu0 %530
    %532 = vrot.lane.b32.xlu0 %v527, 8
    %v533 = vpop.permute.xlu0 %532
    %v536 = vsub.f32 %v524, %v531
    %v537 = vsub.f32 %v525, %v533
    %v538 = vmul.f32 %v283, %v283
    %v539 = vmul.f32 %v285, %v285
    %v540 = vsub.f32 %v536, %v538
    %v541 = vsub.f32 %v537, %v539
    %544 = vrot.lane.b32.xlu0 %v540, 120
    %v545 = vpop.permute.xlu0 %544
    %546 = vrot.lane.b32.xlu0 %v541, 120
    %v547 = vpop.permute.xlu0 %546
    %v550 = vsel %vm382, %v545, 0.0
    %551 = vadd.xlane.f32.xlu0 %v550
    %v552 = vpop.xlane.xlu0 %551
    %v553 = vsel %vm382, %v547, 0.0
    %554 = vadd.xlane.f32.xlu0 %v553
    %v555 = vpop.xlane.xlu0 %554
    %vm556 = vcmask 7168
    %557 = vst.msk [vmem:[%s14] sm:$0xff] %vm556, %v552
    %558 = vst.msk [vmem:[%s14 + $0x8] sm:$0xff] %vm556, %v555
    // Predicated region
    $region54: #{cvae_forward.1} parent=1 // pred_check
      _
    $region55: #{cvae_forward.1} parent=1 // pred_check_branch
      %560 = sbr.rel (0) target = $region57
    $region56: #{cvae_forward.1} parent=1 // pred_region
      %s562 = ssub.s32 256, 256
      %563 = vsyncadd [#allocation3], %s562
      %s564 = sshll.u32 [#allocation2], 4
      %s565 = int_to_ptr.vmem [resolvable:$true] %s564
      %570 = dma.vmem_to_hbm [thread:$0]  %s565, 256, %s13, [#allocation3], 128, 128, 8
    $region57: #{cvae_forward.1} parent=1 // pred_fallthru
      _
    // Predicated region
    $region58: #{cvae_forward.1} parent=1 // pred_check
      _
    $region59: #{cvae_forward.1} parent=1 // pred_check_branch
      %572 = sbr.rel (0) target = $region61
    $region60: #{cvae_forward.1} parent=1 // pred_region
      _
    $region61: #{cvae_forward.1} parent=1 // pred_fallthru
      _
    // Predicated region
    $region62: #{cvae_forward.1} parent=1 // pred_check
      _
    $region63: #{cvae_forward.1} parent=1 // pred_check_branch
      %574 = sbr.rel (0) target = $region65
    $region64: #{cvae_forward.1} parent=1 // pred_region
      %575 = dma.done [#allocation3], 256
    $region65: #{cvae_forward.1} parent=1 // pred_fallthru
      _
    // Predicated region
    $region66: #{cvae_forward.1} parent=1 // pred_check
      _
    $region67: #{cvae_forward.1} parent=1 // pred_check_branch
      %577 = sbr.rel (0) target = $region69
    $region68: #{cvae_forward.1} parent=1 // pred_region
      _
    $region69: #{cvae_forward.1} parent=1 // pred_fallthru
      _
    %578 = vsyncpa [#allocation3], 1

</llo_original>
